<compile_context>
chip_gen: v6e
topology: v6e:2x2x1
jax: 0.10.0
libtpu: 0.0.40
codegen_flags: <defaults>
</compile_context>

<pallas_src>
import functools

import numpy as np
import jax
import jax.numpy as jnp
from jax.experimental import pallas as pl
from jax.experimental.pallas import tpu as pltpu


def _round_up(x: int, m: int) -> int:
    return ((x + m - 1) // m) * m


# ----------------------------------------------------------------------------------------------
# Pallas kernel: LayerNorm + Linear(C->H) + ReLU + Linear(H->C), fused on one row tile
# ----------------------------------------------------------------------------------------------
def transition_kernel(x_ref, gamma_ref, beta_ref, w1_ref, b1_ref, w2_ref, b2_ref,
                      out_ref, *, eps: float):
    x = x_ref[...]                                            # [TM, C] f32

    # LayerNorm over the channel (lane) axis (XLU reduce + EUP rsqrt; negligible vs MXU).
    mean = jnp.mean(x, axis=-1, keepdims=True)                # [TM, 1]
    xc = x - mean
    var = jnp.mean(xc * xc, axis=-1, keepdims=True)           # [TM, 1]
    inv = jax.lax.rsqrt(var + eps)
    xn = xc * inv * gamma_ref[...] + beta_ref[...]            # [TM, C]

    # transition1 + bias + ReLU (MXU matmul, f32 accumulation).
    h = jnp.dot(xn, w1_ref[...], preferred_element_type=jnp.float32) + b1_ref[...]
    h = jnp.maximum(h, 0.0)                                   # [TM, H]

    # transition2 + bias.
    out_ref[...] = (jnp.dot(h, w2_ref[...], preferred_element_type=jnp.float32)
                    + b2_ref[...])                            # [TM, C]


# ----------------------------------------------------------------------------------------------
# Wrapper: flatten rows, auto-size the row tile from a VMEM budget, pad, launch a 1-D grid
# ----------------------------------------------------------------------------------------------
def transition_forward(act, params, *, tile_rows: int | None = None, eps: float = 1e-5):
    orig_shape = act.shape
    orig_dtype = act.dtype
    C = int(orig_shape[-1])
    x2 = act.reshape(-1, C).astype(jnp.float32)               # [M, C]
    M = int(x2.shape[0])

    w1 = params['w1'].astype(jnp.float32)                     # [C, H]
    b1 = params['b1'].astype(jnp.float32)                     # [H]
    w2 = params['w2'].astype(jnp.float32)                     # [H, C]
    b2 = params['b2'].astype(jnp.float32)                     # [C]
    gamma = params['gamma'].astype(jnp.float32)               # [C]
    beta = params['beta'].astype(jnp.float32)                 # [C]
    H = int(w1.shape[1])

    # Resident (fetched once) weight/bias bytes.
    resident_bytes = 4 * (C * H + H * C + H + 3 * C)

    # Auto-size the row tile so double-buffered x/out tiles + the hidden activation fit a
    # conservative VMEM budget (works on v7x's 64 MiB VMEM with headroom).
    if tile_rows is None:
        budget = 40 * 1024 * 1024
        per_row_bytes = 4 * (2 * C + 2 * C + H)               # x(dbuf) + out(dbuf) + hidden
        tm = max(8, (budget - resident_bytes) // max(per_row_bytes, 1))
        tile_rows = min(1024, tm)
    tm = min(int(tile_rows), _round_up(M, 8))
    tm = max(8, (tm // 8) * 8)

    # cdiv-style grid with row padding instead of asserting divisibility.
    Mpad = _round_up(M, tm)
    if Mpad != M:
        x2 = jnp.pad(x2, ((0, Mpad - M), (0, 0)))
    grid = (Mpad // tm,)

    # VMEM limit: double-buffered row tiles + resident weights + hidden temp, with slack.
    tile_bytes = 4 * (2 * tm * C + 2 * tm * C + tm * H) + resident_bytes
    vmem_limit = int(min(64 * 1024 * 1024, max(32 * 1024 * 1024, 2 * tile_bytes)))

    # Advisory cost hint for XLA scheduling around the custom call.
    cost = pl.CostEstimate(
        flops=2 * Mpad * C * H * 2,                           # two matmuls
        transcendentals=Mpad,                                 # one rsqrt per row
        bytes_accessed=4 * (2 * Mpad * C) + resident_bytes,
    )

    out = pl.pallas_call(
        functools.partial(transition_kernel, eps=eps),
        out_shape=jax.ShapeDtypeStruct((Mpad, C), jnp.float32),
        grid_spec=pltpu.PrefetchScalarGridSpec(
            num_scalar_prefetch=0,
            grid=grid,
            in_specs=[
                pl.BlockSpec((tm, C), lambda i: (i, 0)),      # x row tile
                pl.BlockSpec((1, C), lambda i: (0, 0)),       # gamma (resident)
                pl.BlockSpec((1, C), lambda i: (0, 0)),       # beta  (resident)
                pl.BlockSpec((C, H), lambda i: (0, 0)),       # W1    (resident)
                pl.BlockSpec((1, H), lambda i: (0, 0)),       # b1    (resident)
                pl.BlockSpec((H, C), lambda i: (0, 0)),       # W2    (resident)
                pl.BlockSpec((1, C), lambda i: (0, 0)),       # b2    (resident)
            ],
            out_specs=pl.BlockSpec((tm, C), lambda i: (i, 0)),
        ),
        compiler_params=pltpu.CompilerParams(
            dimension_semantics=("parallel",),                # row tiles independent -> megacore
            vmem_limit_bytes=vmem_limit,
        ),
        cost_estimate=cost,
    )(x2, gamma.reshape(1, C), beta.reshape(1, C),
      w1, b1.reshape(1, H), w2, b2.reshape(1, C))

    return out[:M].reshape(orig_shape).astype(orig_dtype)


# ----------------------------------------------------------------------------------------------
# Pure-JAX reference (literal translation of the PyTorch forward) for validation
# ----------------------------------------------------------------------------------------------
def reference_forward(act, params, eps: float = 1e-5):
    x = act.astype(jnp.float32)
    mean = jnp.mean(x, axis=-1, keepdims=True)
    var = jnp.mean(jnp.square(x - mean), axis=-1, keepdims=True)
    xn = (x - mean) / jnp.sqrt(var + eps) * params['gamma'] + params['beta']
    h = jnp.maximum(xn @ params['w1'] + params['b1'], 0.0)
    return h @ params['w2'] + params['b2']


# ----------------------------------------------------------------------------------------------
if __name__ == "__main__":
    key = jax.random.PRNGKey(0)
    k_x, k_g, k_be, k_w1, k_b1, k_w2, k_b2 = jax.random.split(key, 7)

    # Small shapes consistent with the module: act [n_seq=2, n_res=24, norm_channel=128],
    # num_intermediate_factor=4  ->  hidden = 512.
    NORM_CHANNEL = 128
    FACTOR = 4
    HIDDEN = NORM_CHANNEL * FACTOR
    act = jax.random.normal(k_x, (2, 24, NORM_CHANNEL), dtype=jnp.float32)

    lim1 = 1.0 / np.sqrt(float(NORM_CHANNEL))
    lim2 = 1.0 / np.sqrt(float(HIDDEN))
    params = {
        'gamma': 1.0 + 0.1 * jax.random.normal(k_g, (NORM_CHANNEL,), dtype=jnp.float32),
        'beta': 0.1 * jax.random.normal(k_be, (NORM_CHANNEL,), dtype=jnp.float32),
        'w1': jax.random.uniform(k_w1, (NORM_CHANNEL, HIDDEN), jnp.float32, -lim1, lim1),
        'b1': jax.random.uniform(k_b1, (HIDDEN,), jnp.float32, -lim1, lim1),
        'w2': jax.random.uniform(k_w2, (HIDDEN, NORM_CHANNEL), jnp.float32, -lim2, lim2),
        'b2': jax.random.uniform(k_b2, (NORM_CHANNEL,), jnp.float32, -lim2, lim2),
    }

    ref = reference_forward(act, params)

    # Default auto-tiled path (single grid step at this small size).
    out = jax.block_until_ready(transition_forward(act, params))
    np.testing.assert_allclose(np.asarray(out), np.asarray(ref), rtol=1e-3, atol=1e-3)
    assert out.shape == act.shape and out.dtype == jnp.float32

    # Small-tile path: exercises row padding (48 -> 64 rows) and a multi-step parallel grid.
    out2 = jax.block_until_ready(transition_forward(act, params, tile_rows=32))
    np.testing.assert_allclose(np.asarray(out2), np.asarray(ref), rtol=1e-3, atol=1e-3)

    print("KERNEL_OK")
</pallas_src>

<mosaic_0001>
module attributes {stable_mosaic.version = 11 : i64} {
  func.func @transition_kernel(%arg0: i32, %arg1: memref<48x128xf32, #tpu.memory_space<vmem>>, %arg2: memref<1x128xf32, #tpu.memory_space<vmem>>, %arg3: memref<1x128xf32, #tpu.memory_space<vmem>>, %arg4: memref<128x512xf32, #tpu.memory_space<vmem>>, %arg5: memref<1x512xf32, #tpu.memory_space<vmem>>, %arg6: memref<512x128xf32, #tpu.memory_space<vmem>>, %arg7: memref<1x128xf32, #tpu.memory_space<vmem>>, %arg8: memref<48x128xf32, #tpu.memory_space<vmem>>) attributes {dimension_semantics = [#tpu.dimension_semantics<parallel>], iteration_bounds = array<i64: 1>, scalar_prefetch = 0 : i64, scratch_operands = 0 : i64, tpu.core_type = #tpu.core_type<tc>, window_params = [{transform_indices = @transform_0, window_bounds = array<i64: 48, 128>}, {pipeline_mode = #tpu.pipeline_mode<synchronous>, transform_indices = @transform_1, window_bounds = array<i64: 1, 128>}, {pipeline_mode = #tpu.pipeline_mode<synchronous>, transform_indices = @transform_2, window_bounds = array<i64: 1, 128>}, {pipeline_mode = #tpu.pipeline_mode<synchronous>, transform_indices = @transform_3, window_bounds = array<i64: 128, 512>}, {pipeline_mode = #tpu.pipeline_mode<synchronous>, transform_indices = @transform_4, window_bounds = array<i64: 1, 512>}, {pipeline_mode = #tpu.pipeline_mode<synchronous>, transform_indices = @transform_5, window_bounds = array<i64: 512, 128>}, {pipeline_mode = #tpu.pipeline_mode<synchronous>, transform_indices = @transform_6, window_bounds = array<i64: 1, 128>}, {transform_indices = @transform_7, window_bounds = array<i64: 48, 128>}]} {
    %c0 = arith.constant 0 : index
    %c0_0 = arith.constant 0 : index
    %0 = vector.load %arg1[%c0, %c0_0] : memref<48x128xf32, #tpu.memory_space<vmem>>, vector<48x128xf32>
    %cst = arith.constant dense<0.000000e+00> : vector<48xf32>
    %1 = vector.multi_reduction <add>, %0, %cst [1] : vector<48x128xf32> to vector<48xf32>
    %2 = vector.shape_cast %1 : vector<48xf32> to vector<48x1xf32>
    %cst_1 = arith.constant 1.280000e+02 : f32
    %3 = vector.broadcast %cst_1 : f32 to vector<48x1xf32>
    %4 = arith.divf %2, %3 : vector<48x1xf32>
    %5 = vector.broadcast %4 : vector<48x1xf32> to vector<48x128xf32>
    %6 = arith.subf %0, %5 : vector<48x128xf32>
    %7 = arith.mulf %6, %6 : vector<48x128xf32>
    %cst_2 = arith.constant dense<0.000000e+00> : vector<48xf32>
    %8 = vector.multi_reduction <add>, %7, %cst_2 [1] : vector<48x128xf32> to vector<48xf32>
    %9 = vector.shape_cast %8 : vector<48xf32> to vector<48x1xf32>
    %cst_3 = arith.constant 1.280000e+02 : f32
    %10 = vector.broadcast %cst_3 : f32 to vector<48x1xf32>
    %11 = arith.divf %9, %10 : vector<48x1xf32>
    %cst_4 = arith.constant 9.99999974E-6 : f32
    %12 = vector.broadcast %cst_4 : f32 to vector<48x1xf32>
    %13 = arith.addf %11, %12 : vector<48x1xf32>
    %14 = math.rsqrt %13 : vector<48x1xf32>
    %15 = vector.broadcast %14 : vector<48x1xf32> to vector<48x128xf32>
    %16 = arith.mulf %6, %15 : vector<48x128xf32>
    %c0_5 = arith.constant 0 : index
    %c0_6 = arith.constant 0 : index
    %17 = vector.load %arg2[%c0_5, %c0_6] : memref<1x128xf32, #tpu.memory_space<vmem>>, vector<1x128xf32>
    %18 = vector.broadcast %17 : vector<1x128xf32> to vector<48x128xf32>
    %19 = arith.mulf %16, %18 : vector<48x128xf32>
    %c0_7 = arith.constant 0 : index
    %c0_8 = arith.constant 0 : index
    %20 = vector.load %arg3[%c0_7, %c0_8] : memref<1x128xf32, #tpu.memory_space<vmem>>, vector<1x128xf32>
    %21 = vector.broadcast %20 : vector<1x128xf32> to vector<48x128xf32>
    %22 = arith.addf %19, %21 : vector<48x128xf32>
    %c0_9 = arith.constant 0 : index
    %c0_10 = arith.constant 0 : index
    %23 = vector.load %arg4[%c0_9, %c0_10] : memref<128x512xf32, #tpu.memory_space<vmem>>, vector<128x512xf32>
    %cst_11 = arith.constant dense<0.000000e+00> : vector<48x512xf32>
    %24 = tpu.matmul %22, %23, %cst_11 {dimension_numbers = #tpu.dot_dimension_numbers<[1], [0], [0], [1], [0, 0, 1, 1], [], []>} : vector<48x128xf32>, vector<128x512xf32>, vector<48x512xf32> -> vector<48x512xf32>
    %c0_12 = arith.constant 0 : index
    %c0_13 = arith.constant 0 : index
    %25 = vector.load %arg5[%c0_12, %c0_13] : memref<1x512xf32, #tpu.memory_space<vmem>>, vector<1x512xf32>
    %26 = vector.broadcast %25 : vector<1x512xf32> to vector<48x512xf32>
    %27 = arith.addf %24, %26 : vector<48x512xf32>
    %cst_14 = arith.constant 0.000000e+00 : f32
    %28 = vector.broadcast %cst_14 : f32 to vector<48x512xf32>
    %29 = arith.maximumf %27, %28 : vector<48x512xf32>
    %c0_15 = arith.constant 0 : index
    %c0_16 = arith.constant 0 : index
    %30 = vector.load %arg6[%c0_15, %c0_16] : memref<512x128xf32, #tpu.memory_space<vmem>>, vector<512x128xf32>
    %cst_17 = arith.constant dense<0.000000e+00> : vector<48x128xf32>
    %31 = tpu.matmul %29, %30, %cst_17 {dimension_numbers = #tpu.dot_dimension_numbers<[1], [0], [0], [1], [0, 0, 1, 1], [], []>} : vector<48x512xf32>, vector<512x128xf32>, vector<48x128xf32> -> vector<48x128xf32>
    %c0_18 = arith.constant 0 : index
    %c0_19 = arith.constant 0 : index
    %32 = vector.load %arg7[%c0_18, %c0_19] : memref<1x128xf32, #tpu.memory_space<vmem>>, vector<1x128xf32>
    %33 = vector.broadcast %32 : vector<1x128xf32> to vector<48x128xf32>
    %34 = arith.addf %31, %33 : vector<48x128xf32>
    %c0_20 = arith.constant 0 : index
    %c0_21 = arith.constant 0 : index
    %35 = vector.load %arg8[%c0_20, %c0_21] : memref<48x128xf32, #tpu.memory_space<vmem>>, vector<48x128xf32>
    tpu.vector_store %arg8[%c0_20, %c0_21], %34 {strides = array<i32>} : memref<48x128xf32, #tpu.memory_space<vmem>>, vector<48x128xf32>,
    return
  }
  func.func @transform_0(%arg0: i32) -> (i32, i32) {
    %c0_i32 = arith.constant 0 : i32
    %c0_i32_0 = arith.constant 0 : i32
    return %arg0, %c0_i32 : i32, i32
  }
  func.func @transform_1(%arg0: i32) -> (i32, i32) {
    %c0_i32 = arith.constant 0 : i32
    %c0_i32_0 = arith.constant 0 : i32
    %c0_i32_1 = arith.constant 0 : i32
    return %c0_i32, %c0_i32_0 : i32, i32
  }
  func.func @transform_2(%arg0: i32) -> (i32, i32) {
    %c0_i32 = arith.constant 0 : i32
    %c0_i32_0 = arith.constant 0 : i32
    %c0_i32_1 = arith.constant 0 : i32
    return %c0_i32, %c0_i32_0 : i32, i32
  }
  func.func @transform_3(%arg0: i32) -> (i32, i32) {
    %c0_i32 = arith.constant 0 : i32
    %c0_i32_0 = arith.constant 0 : i32
    %c0_i32_1 = arith.constant 0 : i32
    return %c0_i32, %c0_i32_0 : i32, i32
  }
  func.func @transform_4(%arg0: i32) -> (i32, i32) {
    %c0_i32 = arith.constant 0 : i32
    %c0_i32_0 = arith.constant 0 : i32
    %c0_i32_1 = arith.constant 0 : i32
    return %c0_i32, %c0_i32_0 : i32, i32
  }
  func.func @transform_5(%arg0: i32) -> (i32, i32) {
    %c0_i32 = arith.constant 0 : i32
    %c0_i32_0 = arith.constant 0 : i32
    %c0_i32_1 = arith.constant 0 : i32
    return %c0_i32, %c0_i32_0 : i32, i32
  }
  func.func @transform_6(%arg0: i32) -> (i32, i32) {
    %c0_i32 = arith.constant 0 : i32
    %c0_i32_0 = arith.constant 0 : i32
    %c0_i32_1 = arith.constant 0 : i32
    return %c0_i32, %c0_i32_0 : i32, i32
  }
  func.func @transform_7(%arg0: i32) -> (i32, i32) {
    %c0_i32 = arith.constant 0 : i32
    %c0_i32_0 = arith.constant 0 : i32
    return %arg0, %c0_i32 : i32, i32
  }
}

</mosaic_0001>

<llo_original>
// kernel: tpu_custom_call.1
$region0: #{tpu_custom_call.1}
  #allocation0 [shape = 'u32[]', space=smem, size = 0x4, offset = 0x4, fixed_abs, tag = 'smem constant byte address 0x4 - core index']
  #allocation1 [shape = 'u32[144,128]{1,0:T(1,128)}', space=vmem, size = 0x12000, scoped, tag = 'internal scratch']
  %s0 = inlined_call_operand.hbm [shape: f32[48,128], index: 0, kind: input, shape index: {}]
  %s1 = inlined_call_operand.vmem [shape: f32[1,128], index: 1, kind: input, shape index: {}]
  %s2 = inlined_call_operand.vmem [shape: f32[1,128], index: 2, kind: input, shape index: {}]
  %s3 = inlined_call_operand.hbm [shape: f32[128,512], index: 3, kind: input, shape index: {}]
  %s4 = inlined_call_operand.vmem [shape: f32[1,512], index: 4, kind: input, shape index: {}]
  %s5 = inlined_call_operand.hbm [shape: f32[512,128], index: 5, kind: input, shape index: {}]
  %s6 = inlined_call_operand.vmem [shape: f32[1,128], index: 6, kind: input, shape index: {}]
  %s7 = inlined_call_operand.hbm [shape: f32[48,128], index: 7, kind: output, shape index: {}]
  %s8 = sld [smem:[#allocation0]]
  $region50: #{tpu_custom_call.1} parent=0
    _
  %s10 = ssub.s32 1, %s8
  %s11 = scalar_select 0, %s10, %s8
  $region1: #{tpu_custom_call.1} parent=0
    #allocation2 [shape = 'u8[24576]{0}', space=vmem, size = 0x6000, scoped, tag = 'input window, operand 0, single buffered']
    #allocation3 [shape = 's32[1]{0}', space=sflag, size = 0x4, scoped, tag = 'scoped memory for tpu_custom_call.1']
    #allocation4 [shape = 's32[1]{0}', space=sflag, size = 0x4, scoped, tag = 'scoped memory for tpu_custom_call.1']
    #allocation5 [shape = 'u8[262144]{0}', space=vmem, size = 0x40000, scoped, tag = 'input window, operand 3, single buffered']
    #allocation6 [shape = 's32[1]{0}', space=sflag, size = 0x4, scoped, tag = 'scoped memory for tpu_custom_call.1']
    #allocation7 [shape = 'u8[262144]{0}', space=vmem, size = 0x40000, scoped, tag = 'input window, operand 5, single buffered']
    #allocation8 [shape = 'u8[24576]{0}', space=vmem, size = 0x6000, scoped, tag = 'output window, operand 0, single buffered']
    %12 = vsyncpa [#allocation3], 0
    %13 = vsyncpa [#allocation6], 0
    %14 = vsyncpa [#allocation4], 0
    // Predicated region
    $region2: #{tpu_custom_call.1} parent=1 // pred_check
      _
    $region3: #{tpu_custom_call.1} parent=1 // pred_check_branch
      %16 = sbr.rel (0) target = $region5
    $region4: #{tpu_custom_call.1} parent=1 // pred_region
      %s18 = ssub.s32 768, 768
      %19 = vsyncadd [#allocation3], %s18
      %s20 = sshll.u32 [#allocation2], 4
      %s21 = int_to_ptr.vmem [resolvable:$true] %s20
      %26 = dma.hbm_to_vmem [thread:$0]  %s0, 768, %s21, [#allocation3], 128, 128, 8
    $region5: #{tpu_custom_call.1} parent=1 // pred_fallthru
      _
    // Predicated region
    $region6: #{tpu_custom_call.1} parent=1 // pred_check
      _
    $region7: #{tpu_custom_call.1} parent=1 // pred_check_branch
      %28 = sbr.rel (0) target = $region9
    $region8: #{tpu_custom_call.1} parent=1 // pred_region
      _
    $region9: #{tpu_custom_call.1} parent=1 // pred_fallthru
      _
    // Predicated region
    $region10: #{tpu_custom_call.1} parent=1 // pred_check
      _
    $region11: #{tpu_custom_call.1} parent=1 // pred_check_branch
      %30 = sbr.rel (0) target = $region13
    $region12: #{tpu_custom_call.1} parent=1 // pred_region
      _
    $region13: #{tpu_custom_call.1} parent=1 // pred_fallthru
      _
    // Predicated region
    $region14: #{tpu_custom_call.1} parent=1 // pred_check
      _
    $region15: #{tpu_custom_call.1} parent=1 // pred_check_branch
      %32 = sbr.rel (0) target = $region17
    $region16: #{tpu_custom_call.1} parent=1 // pred_region
      %s34 = ssub.s32 8192, 8192
      %35 = vsyncadd [#allocation6], %s34
      %s36 = sshll.u32 [#allocation5], 4
      %s37 = int_to_ptr.vmem [resolvable:$true] %s36
      %42 = dma.hbm_to_vmem [thread:$0]  %s3, 8192, %s37, [#allocation6], 512, 512, 32
    $region17: #{tpu_custom_call.1} parent=1 // pred_fallthru
      _
    // Predicated region
    $region18: #{tpu_custom_call.1} parent=1 // pred_check
      _
    $region19: #{tpu_custom_call.1} parent=1 // pred_check_branch
      %44 = sbr.rel (0) target = $region21
    $region20: #{tpu_custom_call.1} parent=1 // pred_region
      _
    $region21: #{tpu_custom_call.1} parent=1 // pred_fallthru
      _
    // Predicated region
    $region22: #{tpu_custom_call.1} parent=1 // pred_check
      _
    $region23: #{tpu_custom_call.1} parent=1 // pred_check_branch
      %46 = sbr.rel (0) target = $region25
    $region24: #{tpu_custom_call.1} parent=1 // pred_region
      %s48 = ssub.s32 8192, 8192
      %49 = vsyncadd [#allocation6], %s48
      %s50 = sshll.u32 [#allocation7], 4
      %s51 = int_to_ptr.vmem [resolvable:$true] %s50
      %56 = dma.hbm_to_vmem [thread:$0]  %s5, 8192, %s51, [#allocation6], 128, 128, 8
    $region25: #{tpu_custom_call.1} parent=1 // pred_fallthru
      _
    // Predicated region
    $region26: #{tpu_custom_call.1} parent=1 // pred_check
      _
    $region27: #{tpu_custom_call.1} parent=1 // pred_check_branch
      %58 = sbr.rel (0) target = $region29
    $region28: #{tpu_custom_call.1} parent=1 // pred_region
      _
    $region29: #{tpu_custom_call.1} parent=1 // pred_fallthru
      _
    // Predicated region
    $region30: #{tpu_custom_call.1} parent=1 // pred_check
      _
    $region31: #{tpu_custom_call.1} parent=1 // pred_check_branch
      %60 = sbr.rel (0) target = $region33
    $region32: #{tpu_custom_call.1} parent=1 // pred_region
      %61 = dma.done [#allocation3], 768
    $region33: #{tpu_custom_call.1} parent=1 // pred_fallthru
      _
    // Predicated region
    $region34: #{tpu_custom_call.1} parent=1 // pred_check
      _
    $region35: #{tpu_custom_call.1} parent=1 // pred_check_branch
      %63 = sbr.rel (0) target = $region37
    $region36: #{tpu_custom_call.1} parent=1 // pred_region
      %64 = dma.done [#allocation6], 8192
    $region37: #{tpu_custom_call.1} parent=1 // pred_fallthru
      _
    // Predicated region
    $region38: #{tpu_custom_call.1} parent=1 // pred_check
      _
    $region39: #{tpu_custom_call.1} parent=1 // pred_check_branch
      %66 = sbr.rel (0) target = $region41
    $region40: #{tpu_custom_call.1} parent=1 // pred_region
      %67 = dma.done [#allocation6], 8192
    $region41: #{tpu_custom_call.1} parent=1 // pred_fallthru
      _
    %v68 = vld [vmem:[#allocation2] sm:$0xff]
    %v69 = vld [vmem:[#allocation2 + $0x8] sm:$0xff]
    %v70 = vld [vmem:[#allocation2 + $0x10] sm:$0xff]
    %v71 = vld [vmem:[#allocation2 + $0x18] sm:$0xff]
    %v72 = vld [vmem:[#allocation2 + $0x20] sm:$0xff]
    %v73 = vld [vmem:[#allocation2 + $0x28] sm:$0xff]
    %74 = vadd.xlane.f32.xlu0 %v68
    %v75 = vpop.xlane.xlu0 %74
    %76 = vadd.xlane.f32.xlu0 %v69
    %v77 = vpop.xlane.xlu0 %76
    %78 = vadd.xlane.f32.xlu0 %v70
    %v79 = vpop.xlane.xlu0 %78
    %80 = vadd.xlane.f32.xlu0 %v71
    %v81 = vpop.xlane.xlu0 %80
    %82 = vadd.xlane.f32.xlu0 %v72
    %v83 = vpop.xlane.xlu0 %82
    %84 = vadd.xlane.f32.xlu0 %v73
    %v85 = vpop.xlane.xlu0 %84
    %v86 = vrcp.pop 128.0
    %v87 = vmul.f32 %v75, %v86
    %v88 = vmul.f32 %v77, %v86
    %v89 = vmul.f32 %v79, %v86
    %v90 = vmul.f32 %v81, %v86
    %v91 = vmul.f32 %v83, %v86
    %v92 = vmul.f32 %v85, %v86
    %v93 = vsub.f32 %v68, %v87
    %v94 = vsub.f32 %v69, %v88
    %v95 = vsub.f32 %v70, %v89
    %v96 = vsub.f32 %v71, %v90
    %v97 = vsub.f32 %v72, %v91
    %v98 = vsub.f32 %v73, %v92
    %v99 = vmul.f32 %v93, %v93
    %v100 = vmul.f32 %v94, %v94
    %v101 = vmul.f32 %v95, %v95
    %v102 = vmul.f32 %v96, %v96
    %v103 = vmul.f32 %v97, %v97
    %v104 = vmul.f32 %v98, %v98
    %105 = vadd.xlane.f32.xlu0 %v99
    %v106 = vpop.xlane.xlu0 %105
    %107 = vadd.xlane.f32.xlu0 %v100
    %v108 = vpop.xlane.xlu0 %107
    %109 = vadd.xlane.f32.xlu0 %v101
    %v110 = vpop.xlane.xlu0 %109
    %111 = vadd.xlane.f32.xlu0 %v102
    %v112 = vpop.xlane.xlu0 %111
    %113 = vadd.xlane.f32.xlu0 %v103
    %v114 = vpop.xlane.xlu0 %113
    %115 = vadd.xlane.f32.xlu0 %v104
    %v116 = vpop.xlane.xlu0 %115
    %v117 = vmul.f32 %v106, %v86
    %v118 = vmul.f32 %v108, %v86
    %v119 = vmul.f32 %v110, %v86
    %v120 = vmul.f32 %v112, %v86
    %v121 = vmul.f32 %v114, %v86
    %v122 = vmul.f32 %v116, %v86
    %v123 = vadd.f32 %v117, 1e-05
    %v124 = vadd.f32 %v118, 1e-05
    %v125 = vadd.f32 %v119, 1e-05
    %v126 = vadd.f32 %v120, 1e-05
    %v127 = vadd.f32 %v121, 1e-05
    %v128 = vadd.f32 %v122, 1e-05
    %v129 = vrsqrt.pop %v123
    %v130 = vrsqrt.pop %v124
    %v131 = vrsqrt.pop %v125
    %v132 = vrsqrt.pop %v126
    %v133 = vrsqrt.pop %v127
    %v134 = vrsqrt.pop %v128
    %v135 = vmul.f32 %v93, %v129
    %v136 = vmul.f32 %v94, %v130
    %v137 = vmul.f32 %v95, %v131
    %v138 = vmul.f32 %v96, %v132
    %v139 = vmul.f32 %v97, %v133
    %v140 = vmul.f32 %v98, %v134
    %v141 = vld [vmem:[%s1] sm:$0x1]
    %v143 = vlaneseq
    %v144 = vshrl.u32 %v143, 7
    %v145 = vsub.s32 0, %v144
    %v146 = vrot.slane %v141, %v145
    %v148 = vmul.f32 %v135, %v146
    %v149 = vmul.f32 %v136, %v146
    %v150 = vmul.f32 %v137, %v146
    %v151 = vmul.f32 %v138, %v146
    %v152 = vmul.f32 %v139, %v146
    %v153 = vmul.f32 %v140, %v146
    %v154 = vld [vmem:[%s2] sm:$0x1]
    %v156 = vlaneseq
    %v157 = vshrl.u32 %v156, 7
    %v158 = vsub.s32 0, %v157
    %v159 = vrot.slane %v154, %v158
    %v161 = vadd.f32 %v148, %v159
    %v162 = vadd.f32 %v149, %v159
    %v163 = vadd.f32 %v150, %v159
    %v164 = vadd.f32 %v151, %v159
    %v165 = vadd.f32 %v152, %v159
    %v166 = vadd.f32 %v153, %v159
    %v167 = vld [vmem:[#allocation5] sm:$0xff]
    %v168 = vld [vmem:[#allocation5 + $0x8] sm:$0xff]
    %v169 = vld [vmem:[#allocation5 + $0x10] sm:$0xff]
    %v170 = vld [vmem:[#allocation5 + $0x18] sm:$0xff]
    %v171 = vld [vmem:[#allocation5 + $0x20] sm:$0xff]
    %v172 = vld [vmem:[#allocation5 + $0x28] sm:$0xff]
    %v173 = vld [vmem:[#allocation5 + $0x30] sm:$0xff]
    %v174 = vld [vmem:[#allocation5 + $0x38] sm:$0xff]
    %v175 = vld [vmem:[#allocation5 + $0x40] sm:$0xff]
    %v176 = vld [vmem:[#allocation5 + $0x48] sm:$0xff]
    %v177 = vld [vmem:[#allocation5 + $0x50] sm:$0xff]
    %v178 = vld [vmem:[#allocation5 + $0x58] sm:$0xff]
    %v179 = vld [vmem:[#allocation5 + $0x60] sm:$0xff]
    %v180 = vld [vmem:[#allocation5 + $0x68] sm:$0xff]
    %v181 = vld [vmem:[#allocation5 + $0x70] sm:$0xff]
    %v182 = vld [vmem:[#allocation5 + $0x78] sm:$0xff]
    %v183 = vld [vmem:[#allocation5 + $0x80] sm:$0xff]
    %v184 = vld [vmem:[#allocation5 + $0x88] sm:$0xff]
    %v185 = vld [vmem:[#allocation5 + $0x90] sm:$0xff]
    %v186 = vld [vmem:[#allocation5 + $0x98] sm:$0xff]
    %v187 = vld [vmem:[#allocation5 + $0xa0] sm:$0xff]
    %v188 = vld [vmem:[#allocation5 + $0xa8] sm:$0xff]
    %v189 = vld [vmem:[#allocation5 + $0xb0] sm:$0xff]
    %v190 = vld [vmem:[#allocation5 + $0xb8] sm:$0xff]
    %v191 = vld [vmem:[#allocation5 + $0xc0] sm:$0xff]
    %v192 = vld [vmem:[#allocation5 + $0xc8] sm:$0xff]
    %v193 = vld [vmem:[#allocation5 + $0xd0] sm:$0xff]
    %v194 = vld [vmem:[#allocation5 + $0xd8] sm:$0xff]
    %v195 = vld [vmem:[#allocation5 + $0xe0] sm:$0xff]
    %v196 = vld [vmem:[#allocation5 + $0xe8] sm:$0xff]
    %v197 = vld [vmem:[#allocation5 + $0xf0] sm:$0xff]
    %v198 = vld [vmem:[#allocation5 + $0xf8] sm:$0xff]
    %v199 = vld [vmem:[#allocation5 + $0x100] sm:$0xff]
    %v200 = vld [vmem:[#allocation5 + $0x108] sm:$0xff]
    %v201 = vld [vmem:[#allocation5 + $0x110] sm:$0xff]
    %v202 = vld [vmem:[#allocation5 + $0x118] sm:$0xff]
    %v203 = vld [vmem:[#allocation5 + $0x120] sm:$0xff]
    %v204 = vld [vmem:[#allocation5 + $0x128] sm:$0xff]
    %v205 = vld [vmem:[#allocation5 + $0x130] sm:$0xff]
    %v206 = vld [vmem:[#allocation5 + $0x138] sm:$0xff]
    %v207 = vld [vmem:[#allocation5 + $0x140] sm:$0xff]
    %v208 = vld [vmem:[#allocation5 + $0x148] sm:$0xff]
    %v209 = vld [vmem:[#allocation5 + $0x150] sm:$0xff]
    %v210 = vld [vmem:[#allocation5 + $0x158] sm:$0xff]
    %v211 = vld [vmem:[#allocation5 + $0x160] sm:$0xff]
    %v212 = vld [vmem:[#allocation5 + $0x168] sm:$0xff]
    %v213 = vld [vmem:[#allocation5 + $0x170] sm:$0xff]
    %v214 = vld [vmem:[#allocation5 + $0x178] sm:$0xff]
    %v215 = vld [vmem:[#allocation5 + $0x180] sm:$0xff]
    %v216 = vld [vmem:[#allocation5 + $0x188] sm:$0xff]
    %v217 = vld [vmem:[#allocation5 + $0x190] sm:$0xff]
    %v218 = vld [vmem:[#allocation5 + $0x198] sm:$0xff]
    %v219 = vld [vmem:[#allocation5 + $0x1a0] sm:$0xff]
    %v220 = vld [vmem:[#allocation5 + $0x1a8] sm:$0xff]
    %v221 = vld [vmem:[#allocation5 + $0x1b0] sm:$0xff]
    %v222 = vld [vmem:[#allocation5 + $0x1b8] sm:$0xff]
    %v223 = vld [vmem:[#allocation5 + $0x1c0] sm:$0xff]
    %v224 = vld [vmem:[#allocation5 + $0x1c8] sm:$0xff]
    %v225 = vld [vmem:[#allocation5 + $0x1d0] sm:$0xff]
    %v226 = vld [vmem:[#allocation5 + $0x1d8] sm:$0xff]
    %v227 = vld [vmem:[#allocation5 + $0x1e0] sm:$0xff]
    %v228 = vld [vmem:[#allocation5 + $0x1e8] sm:$0xff]
    %v229 = vld [vmem:[#allocation5 + $0x1f0] sm:$0xff]
    %v230 = vld [vmem:[#allocation5 + $0x1f8] sm:$0xff]
    %v231 = vld [vmem:[%s4] sm:$0xf]
    %v233 = vlaneseq
    %v234 = vshrl.u32 %v233, 7
    %v235 = vsub.s32 0, %v234
    %v236 = vrot.slane %v231, %v235
    %v237 = vlaneseq
    %v238 = vshrl.u32 %v237, 7
    %v239 = vsub.s32 1, %v238
    %v240 = vrot.slane %v231, %v239
    %v241 = vlaneseq
    %v242 = vshrl.u32 %v241, 7
    %v243 = vsub.s32 2, %v242
    %v244 = vrot.slane %v231, %v243
    %v245 = vlaneseq
    %v246 = vshrl.u32 %v245, 7
    %v247 = vsub.s32 3, %v246
    %v248 = vrot.slane %v231, %v247
    %253 = vmatprep.subr.mxu0 %v228
    %254 = vmatpush1.msra.mxu0 %v227
    %255 = vmatprep.subr.mxu0 %v224
    %256 = vmatpush1.msra.mxu0 %v223
    %257 = vmatprep.subr.mxu0 %v220
    %258 = vmatpush1.msra.mxu0 %v219
    %259 = vmatprep.subr.mxu0 %v216
    %260 = vmatpush1.msra.mxu0 %v215
    %261 = vmatprep.subr.mxu0 %v212
    %262 = vmatpush1.msra.mxu0 %v211
    %263 = vmatprep.subr.mxu0 %v208
    %264 = vmatpush1.msra.mxu0 %v207
    %265 = vmatprep.subr.mxu0 %v204
    %266 = vmatpush1.msra.mxu0 %v203
    %267 = vmatprep.subr.mxu0 %v200
    %268 = vmatpush1.msra.mxu0 %v199
    %269 = vmatprep.subr.mxu0 %v196
    %270 = vmatpush1.msra.mxu0 %v195
    %271 = vmatprep.subr.mxu0 %v192
    %272 = vmatpush1.msra.mxu0 %v191
    %273 = vmatprep.subr.mxu0 %v188
    %274 = vmatpush1.msra.mxu0 %v187
    %275 = vmatprep.subr.mxu0 %v184
    %276 = vmatpush1.msra.mxu0 %v183
    %277 = vmatprep.subr.mxu0 %v180
    %278 = vmatpush1.msra.mxu0 %v179
    %279 = vmatprep.subr.mxu0 %v176
    %280 = vmatpush1.msra.mxu0 %v175
    %281 = vmatprep.subr.mxu0 %v172
    %282 = vmatpush1.msra.mxu0 %v171
    %283 = vmatprep.subr.mxu0 %v168
    %284 = vmatpush1.msra.mxu0 %v167
    %285 = vmatprep.subr.mxu0 0.0
    %286 = vmatpush2.msra.mxu0 0.0
    %287 = vmatprep.subr.mxu0 0.0
    %288 = vmatpush2.msra.mxu0 0.0
    %289 = vmatprep.subr.mxu0 0.0
    %290 = vmatpush2.msra.mxu0 0.0
    %291 = vmatprep.subr.mxu0 0.0
    %292 = vmatpush2.msra.mxu0 0.0
    %293 = vmatprep.subr.mxu0 0.0
    %294 = vmatpush2.msra.mxu0 0.0
    %295 = vmatprep.subr.mxu0 0.0
    %296 = vmatpush2.msra.mxu0 0.0
    %297 = vmatprep.subr.mxu0 0.0
    %298 = vmatpush2.msra.mxu0 0.0
    %299 = vmatprep.subr.mxu0 0.0
    %300 = vmatpush2.msra.mxu0 0.0
    %301 = vmatprep.subr.mxu0 0.0
    %302 = vmatpush2.msra.mxu0 0.0
    %303 = vmatprep.subr.mxu0 0.0
    %304 = vmatpush2.msra.mxu0 0.0
    %305 = vmatprep.subr.mxu0 0.0
    %306 = vmatpush2.msra.mxu0 0.0
    %307 = vmatprep.subr.mxu0 0.0
    %308 = vmatpush2.msra.mxu0 0.0
    %309 = vmatprep.subr.mxu0 0.0
    %310 = vmatpush2.msra.mxu0 0.0
    %311 = vmatprep.subr.mxu0 0.0
    %312 = vmatpush2.msra.mxu0 0.0
    %313 = vmatprep.subr.mxu0 0.0
    %314 = vmatpush2.msra.mxu0 0.0
    %315 = vmatprep.subr.mxu0 0.0
    %316 = vmatpush2.msra.mxu0 0.0
    %317 = vmatprep.mubr.f32.mxu0 0.0
    %318 = vmatmul.mubr.f32.gmra.mxu0 %v161
    %v319 = vpop.f32.mrf.mxu0
    %v320 = vadd.f32 %v236, %v319
    %v321 = vpop.f32.mrf.mxu0
    %v322 = vadd.f32 %v240, %v321
    %323 = vmatprep.mubr.f32.mxu0 0.0
    %324 = vmatmul.mubr.f32.gmra.mxu0 %v162
    %v325 = vpop.f32.mrf.mxu0
    %v326 = vadd.f32 %v236, %v325
    %v327 = vpop.f32.mrf.mxu0
    %v328 = vadd.f32 %v240, %v327
    %329 = vmatprep.mubr.f32.mxu0 0.0
    %330 = vmatmul.mubr.f32.gmra.mxu0 %v163
    %v331 = vpop.f32.mrf.mxu0
    %v332 = vadd.f32 %v236, %v331
    %v333 = vpop.f32.mrf.mxu0
    %v334 = vadd.f32 %v240, %v333
    %335 = vmatprep.mubr.f32.mxu0 0.0
    %336 = vmatmul.mubr.f32.gmra.mxu0 %v164
    %v337 = vpop.f32.mrf.mxu0
    %v338 = vadd.f32 %v236, %v337
    %v339 = vpop.f32.mrf.mxu0
    %v340 = vadd.f32 %v240, %v339
    %341 = vmatprep.mubr.f32.mxu0 0.0
    %342 = vmatmul.mubr.f32.gmra.mxu0 %v165
    %v343 = vpop.f32.mrf.mxu0
    %v344 = vadd.f32 %v236, %v343
    %v345 = vpop.f32.mrf.mxu0
    %v346 = vadd.f32 %v240, %v345
    %347 = vmatprep.mubr.f32.mxu0 0.0
    %348 = vmatmul.mubr.f32.gmra.mxu0 %v166
    %v349 = vpop.f32.mrf.mxu0
    %v350 = vadd.f32 %v236, %v349
    %v351 = vpop.f32.mrf.mxu0
    %v352 = vadd.f32 %v240, %v351
    %353 = vdwg.mxu0
    %354 = vmatprep.subr.mxu0 %v230
    %355 = vmatpush1.msra.mxu0 %v229
    %356 = vmatprep.subr.mxu0 %v226
    %357 = vmatpush1.msra.mxu0 %v225
    %358 = vmatprep.subr.mxu0 %v222
    %359 = vmatpush1.msra.mxu0 %v221
    %360 = vmatprep.subr.mxu0 %v218
    %361 = vmatpush1.msra.mxu0 %v217
    %362 = vmatprep.subr.mxu0 %v214
    %363 = vmatpush1.msra.mxu0 %v213
    %364 = vmatprep.subr.mxu0 %v210
    %365 = vmatpush1.msra.mxu0 %v209
    %366 = vmatprep.subr.mxu0 %v206
    %367 = vmatpush1.msra.mxu0 %v205
    %368 = vmatprep.subr.mxu0 %v202
    %369 = vmatpush1.msra.mxu0 %v201
    %370 = vmatprep.subr.mxu0 %v198
    %371 = vmatpush1.msra.mxu0 %v197
    %372 = vmatprep.subr.mxu0 %v194
    %373 = vmatpush1.msra.mxu0 %v193
    %374 = vmatprep.subr.mxu0 %v190
    %375 = vmatpush1.msra.mxu0 %v189
    %376 = vmatprep.subr.mxu0 %v186
    %377 = vmatpush1.msra.mxu0 %v185
    %378 = vmatprep.subr.mxu0 %v182
    %379 = vmatpush1.msra.mxu0 %v181
    %380 = vmatprep.subr.mxu0 %v178
    %381 = vmatpush1.msra.mxu0 %v177
    %382 = vmatprep.subr.mxu0 %v174
    %383 = vmatpush1.msra.mxu0 %v173
    %384 = vmatprep.subr.mxu0 %v170
    %385 = vmatpush1.msra.mxu0 %v169
    %386 = vmatprep.subr.mxu0 0.0
    %387 = vmatpush2.msra.mxu0 0.0
    %388 = vmatprep.subr.mxu0 0.0
    %389 = vmatpush2.msra.mxu0 0.0
    %390 = vmatprep.subr.mxu0 0.0
    %391 = vmatpush2.msra.mxu0 0.0
    %392 = vmatprep.subr.mxu0 0.0
    %393 = vmatpush2.msra.mxu0 0.0
    %394 = vmatprep.subr.mxu0 0.0
    %395 = vmatpush2.msra.mxu0 0.0
    %396 = vmatprep.subr.mxu0 0.0
    %397 = vmatpush2.msra.mxu0 0.0
    %398 = vmatprep.subr.mxu0 0.0
    %399 = vmatpush2.msra.mxu0 0.0
    %400 = vmatprep.subr.mxu0 0.0
    %401 = vmatpush2.msra.mxu0 0.0
    %402 = vmatprep.subr.mxu0 0.0
    %403 = vmatpush2.msra.mxu0 0.0
    %404 = vmatprep.subr.mxu0 0.0
    %405 = vmatpush2.msra.mxu0 0.0
    %406 = vmatprep.subr.mxu0 0.0
    %407 = vmatpush2.msra.mxu0 0.0
    %408 = vmatprep.subr.mxu0 0.0
    %409 = vmatpush2.msra.mxu0 0.0
    %410 = vmatprep.subr.mxu0 0.0
    %411 = vmatpush2.msra.mxu0 0.0
    %412 = vmatprep.subr.mxu0 0.0
    %413 = vmatpush2.msra.mxu0 0.0
    %414 = vmatprep.subr.mxu0 0.0
    %415 = vmatpush2.msra.mxu0 0.0
    %416 = vmatprep.subr.mxu0 0.0
    %417 = vmatpush2.msra.mxu0 0.0
    %418 = vmatprep.mubr.f32.mxu0 0.0
    %419 = vmatmul.mubr.f32.gmra.mxu0 %v161
    %v420 = vpop.f32.mrf.mxu0
    %v421 = vadd.f32 %v244, %v420
    %v422 = vpop.f32.mrf.mxu0
    %v423 = vadd.f32 %v248, %v422
    %424 = vmatprep.mubr.f32.mxu0 0.0
    %425 = vmatmul.mubr.f32.gmra.mxu0 %v162
    %v426 = vpop.f32.mrf.mxu0
    %v427 = vadd.f32 %v244, %v426
    %v428 = vpop.f32.mrf.mxu0
    %v429 = vadd.f32 %v248, %v428
    %430 = vmatprep.mubr.f32.mxu0 0.0
    %431 = vmatmul.mubr.f32.gmra.mxu0 %v163
    %v432 = vpop.f32.mrf.mxu0
    %v433 = vadd.f32 %v244, %v432
    %v434 = vpop.f32.mrf.mxu0
    %v435 = vadd.f32 %v248, %v434
    %436 = vmatprep.mubr.f32.mxu0 0.0
    %437 = vmatmul.mubr.f32.gmra.mxu0 %v164
    %v438 = vpop.f32.mrf.mxu0
    %v439 = vadd.f32 %v244, %v438
    %v440 = vpop.f32.mrf.mxu0
    %v441 = vadd.f32 %v248, %v440
    %442 = vmatprep.mubr.f32.mxu0 0.0
    %443 = vmatmul.mubr.f32.gmra.mxu0 %v165
    %v444 = vpop.f32.mrf.mxu0
    %v445 = vadd.f32 %v244, %v444
    %v446 = vpop.f32.mrf.mxu0
    %v447 = vadd.f32 %v248, %v446
    %448 = vmatprep.mubr.f32.mxu0 0.0
    %449 = vmatmul.mubr.f32.gmra.mxu0 %v166
    %v450 = vpop.f32.mrf.mxu0
    %v451 = vadd.f32 %v244, %v450
    %v452 = vpop.f32.mrf.mxu0
    %v453 = vadd.f32 %v248, %v452
    %454 = vdwg.mxu0
    %v455 = vmax.f32 %v320, 0.0
    %v456 = vmax.f32 %v322, 0.0
    %v457 = vmax.f32 %v421, 0.0
    %v458 = vmax.f32 %v423, 0.0
    %v459 = vmax.f32 %v326, 0.0
    %v460 = vmax.f32 %v328, 0.0
    %v461 = vmax.f32 %v427, 0.0
    %v462 = vmax.f32 %v429, 0.0
    %v463 = vmax.f32 %v332, 0.0
    %v464 = vmax.f32 %v334, 0.0
    %v465 = vmax.f32 %v433, 0.0
    %v466 = vmax.f32 %v435, 0.0
    %v467 = vmax.f32 %v338, 0.0
    %v468 = vmax.f32 %v340, 0.0
    %v469 = vmax.f32 %v439, 0.0
    %v470 = vmax.f32 %v441, 0.0
    %v471 = vmax.f32 %v344, 0.0
    %v472 = vmax.f32 %v346, 0.0
    %v473 = vmax.f32 %v445, 0.0
    %v474 = vmax.f32 %v447, 0.0
    %v475 = vmax.f32 %v350, 0.0
    %v476 = vmax.f32 %v352, 0.0
    %v477 = vmax.f32 %v451, 0.0
    %v478 = vmax.f32 %v453, 0.0
    %v479 = vld [vmem:[#allocation7] sm:$0xff]
    %v480 = vld [vmem:[#allocation7 + $0x8] sm:$0xff]
    %v481 = vld [vmem:[#allocation7 + $0x10] sm:$0xff]
    %v482 = vld [vmem:[#allocation7 + $0x18] sm:$0xff]
    %v483 = vld [vmem:[#allocation7 + $0x20] sm:$0xff]
    %v484 = vld [vmem:[#allocation7 + $0x28] sm:$0xff]
    %v485 = vld [vmem:[#allocation7 + $0x30] sm:$0xff]
    %v486 = vld [vmem:[#allocation7 + $0x38] sm:$0xff]
    %v487 = vld [vmem:[#allocation7 + $0x40] sm:$0xff]
    %v488 = vld [vmem:[#allocation7 + $0x48] sm:$0xff]
    %v489 = vld [vmem:[#allocation7 + $0x50] sm:$0xff]
    %v490 = vld [vmem:[#allocation7 + $0x58] sm:$0xff]
    %v491 = vld [vmem:[#allocation7 + $0x60] sm:$0xff]
    %v492 = vld [vmem:[#allocation7 + $0x68] sm:$0xff]
    %v493 = vld [vmem:[#allocation7 + $0x70] sm:$0xff]
    %v494 = vld [vmem:[#allocation7 + $0x78] sm:$0xff]
    %v495 = vld [vmem:[#allocation7 + $0x80] sm:$0xff]
    %v496 = vld [vmem:[#allocation7 + $0x88] sm:$0xff]
    %v497 = vld [vmem:[#allocation7 + $0x90] sm:$0xff]
    %v498 = vld [vmem:[#allocation7 + $0x98] sm:$0xff]
    %v499 = vld [vmem:[#allocation7 + $0xa0] sm:$0xff]
    %v500 = vld [vmem:[#allocation7 + $0xa8] sm:$0xff]
    %v501 = vld [vmem:[#allocation7 + $0xb0] sm:$0xff]
    %v502 = vld [vmem:[#allocation7 + $0xb8] sm:$0xff]
    %v503 = vld [vmem:[#allocation7 + $0xc0] sm:$0xff]
    %v504 = vld [vmem:[#allocation7 + $0xc8] sm:$0xff]
    %v505 = vld [vmem:[#allocation7 + $0xd0] sm:$0xff]
    %v506 = vld [vmem:[#allocation7 + $0xd8] sm:$0xff]
    %v507 = vld [vmem:[#allocation7 + $0xe0] sm:$0xff]
    %v508 = vld [vmem:[#allocation7 + $0xe8] sm:$0xff]
    %v509 = vld [vmem:[#allocation7 + $0xf0] sm:$0xff]
    %v510 = vld [vmem:[#allocation7 + $0xf8] sm:$0xff]
    %v511 = vld [vmem:[#allocation7 + $0x100] sm:$0xff]
    %v512 = vld [vmem:[#allocation7 + $0x108] sm:$0xff]
    %v513 = vld [vmem:[#allocation7 + $0x110] sm:$0xff]
    %v514 = vld [vmem:[#allocation7 + $0x118] sm:$0xff]
    %v515 = vld [vmem:[#allocation7 + $0x120] sm:$0xff]
    %v516 = vld [vmem:[#allocation7 + $0x128] sm:$0xff]
    %v517 = vld [vmem:[#allocation7 + $0x130] sm:$0xff]
    %v518 = vld [vmem:[#allocation7 + $0x138] sm:$0xff]
    %v519 = vld [vmem:[#allocation7 + $0x140] sm:$0xff]
    %v520 = vld [vmem:[#allocation7 + $0x148] sm:$0xff]
    %v521 = vld [vmem:[#allocation7 + $0x150] sm:$0xff]
    %v522 = vld [vmem:[#allocation7 + $0x158] sm:$0xff]
    %v523 = vld [vmem:[#allocation7 + $0x160] sm:$0xff]
    %v524 = vld [vmem:[#allocation7 + $0x168] sm:$0xff]
    %v525 = vld [vmem:[#allocation7 + $0x170] sm:$0xff]
    %v526 = vld [vmem:[#allocation7 + $0x178] sm:$0xff]
    %v527 = vld [vmem:[#allocation7 + $0x180] sm:$0xff]
    %v528 = vld [vmem:[#allocation7 + $0x188] sm:$0xff]
    %v529 = vld [vmem:[#allocation7 + $0x190] sm:$0xff]
    %v530 = vld [vmem:[#allocation7 + $0x198] sm:$0xff]
    %v531 = vld [vmem:[#allocation7 + $0x1a0] sm:$0xff]
    %v532 = vld [vmem:[#allocation7 + $0x1a8] sm:$0xff]
    %v533 = vld [vmem:[#allocation7 + $0x1b0] sm:$0xff]
    %v534 = vld [vmem:[#allocation7 + $0x1b8] sm:$0xff]
    %v535 = vld [vmem:[#allocation7 + $0x1c0] sm:$0xff]
    %v536 = vld [vmem:[#allocation7 + $0x1c8] sm:$0xff]
    %v537 = vld [vmem:[#allocation7 + $0x1d0] sm:$0xff]
    %v538 = vld [vmem:[#allocation7 + $0x1d8] sm:$0xff]
    %v539 = vld [vmem:[#allocation7 + $0x1e0] sm:$0xff]
    %v540 = vld [vmem:[#allocation7 + $0x1e8] sm:$0xff]
    %v541 = vld [vmem:[#allocation7 + $0x1f0] sm:$0xff]
    %v542 = vld [vmem:[#allocation7 + $0x1f8] sm:$0xff]
    %v543 = vld [vmem:[%s6] sm:$0x1]
    %v545 = vlaneseq
    %v546 = vshrl.u32 %v545, 7
    %v547 = vsub.s32 0, %v546
    %v548 = vrot.slane %v543, %v547
    %550 = vmatprep.subr.mxu0 0.0
    %551 = vmatpush1.msra.mxu0 %v494
    %552 = vmatprep.subr.mxu0 0.0
    %553 = vmatpush1.msra.mxu0 %v493
    %554 = vmatprep.subr.mxu0 0.0
    %555 = vmatpush1.msra.mxu0 %v492
    %556 = vmatprep.subr.mxu0 0.0
    %557 = vmatpush1.msra.mxu0 %v491
    %558 = vmatprep.subr.mxu0 0.0
    %559 = vmatpush1.msra.mxu0 %v490
    %560 = vmatprep.subr.mxu0 0.0
    %561 = vmatpush1.msra.mxu0 %v489
    %562 = vmatprep.subr.mxu0 0.0
    %563 = vmatpush1.msra.mxu0 %v488
    %564 = vmatprep.subr.mxu0 0.0
    %565 = vmatpush1.msra.mxu0 %v487
    %566 = vmatprep.subr.mxu0 0.0
    %567 = vmatpush1.msra.mxu0 %v486
    %568 = vmatprep.subr.mxu0 0.0
    %569 = vmatpush1.msra.mxu0 %v485
    %570 = vmatprep.subr.mxu0 0.0
    %571 = vmatpush1.msra.mxu0 %v484
    %572 = vmatprep.subr.mxu0 0.0
    %573 = vmatpush1.msra.mxu0 %v483
    %574 = vmatprep.subr.mxu0 0.0
    %575 = vmatpush1.msra.mxu0 %v482
    %576 = vmatprep.subr.mxu0 0.0
    %577 = vmatpush1.msra.mxu0 %v481
    %578 = vmatprep.subr.mxu0 0.0
    %579 = vmatpush1.msra.mxu0 %v480
    %580 = vmatprep.subr.mxu0 0.0
    %581 = vmatpush1.msra.mxu0 %v479
    %582 = vmatprep.subr.mxu0 0.0
    %583 = vmatpush2.msra.mxu0 %v510
    %584 = vmatprep.subr.mxu0 0.0
    %585 = vmatpush2.msra.mxu0 %v509
    %586 = vmatprep.subr.mxu0 0.0
    %587 = vmatpush2.msra.mxu0 %v508
    %588 = vmatprep.subr.mxu0 0.0
    %589 = vmatpush2.msra.mxu0 %v507
    %590 = vmatprep.subr.mxu0 0.0
    %591 = vmatpush2.msra.mxu0 %v506
    %592 = vmatprep.subr.mxu0 0.0
    %593 = vmatpush2.msra.mxu0 %v505
    %594 = vmatprep.subr.mxu0 0.0
    %595 = vmatpush2.msra.mxu0 %v504
    %596 = vmatprep.subr.mxu0 0.0
    %597 = vmatpush2.msra.mxu0 %v503
    %598 = vmatprep.subr.mxu0 0.0
    %599 = vmatpush2.msra.mxu0 %v502
    %600 = vmatprep.subr.mxu0 0.0
    %601 = vmatpush2.msra.mxu0 %v501
    %602 = vmatprep.subr.mxu0 0.0
    %603 = vmatpush2.msra.mxu0 %v500
    %604 = vmatprep.subr.mxu0 0.0
    %605 = vmatpush2.msra.mxu0 %v499
    %606 = vmatprep.subr.mxu0 0.0
    %607 = vmatpush2.msra.mxu0 %v498
    %608 = vmatprep.subr.mxu0 0.0
    %609 = vmatpush2.msra.mxu0 %v497
    %610 = vmatprep.subr.mxu0 0.0
    %611 = vmatpush2.msra.mxu0 %v496
    %612 = vmatprep.subr.mxu0 0.0
    %613 = vmatpush2.msra.mxu0 %v495
    %614 = vmatprep.mubr.f32.mxu0 %v456
    %615 = vmatmul.mubr.f32.gmra.mxu0 %v455
    %v616 = vpop.f32.mrf.mxu0
    %v617 = vadd.f32 %v548, %v616
    %v618 = vpop.f32.mrf.mxu0
    %619 = vmatprep.mubr.f32.mxu0 %v460
    %620 = vmatmul.mubr.f32.gmra.mxu0 %v459
    %v621 = vpop.f32.mrf.mxu0
    %v622 = vadd.f32 %v548, %v621
    %v623 = vpop.f32.mrf.mxu0
    %624 = vmatprep.mubr.f32.mxu0 %v464
    %625 = vmatmul.mubr.f32.gmra.mxu0 %v463
    %v626 = vpop.f32.mrf.mxu0
    %v627 = vadd.f32 %v548, %v626
    %v628 = vpop.f32.mrf.mxu0
    %629 = vmatprep.mubr.f32.mxu0 %v468
    %630 = vmatmul.mubr.f32.gmra.mxu0 %v467
    %v631 = vpop.f32.mrf.mxu0
    %v632 = vadd.f32 %v548, %v631
    %v633 = vpop.f32.mrf.mxu0
    %634 = vmatprep.mubr.f32.mxu0 %v472
    %635 = vmatmul.mubr.f32.gmra.mxu0 %v471
    %v636 = vpop.f32.mrf.mxu0
    %v637 = vadd.f32 %v548, %v636
    %v638 = vpop.f32.mrf.mxu0
    %639 = vmatprep.mubr.f32.mxu0 %v476
    %640 = vmatmul.mubr.f32.gmra.mxu0 %v475
    %v641 = vpop.f32.mrf.mxu0
    %v642 = vadd.f32 %v548, %v641
    %v643 = vpop.f32.mrf.mxu0
    %644 = vdwg.mxu0
    %645 = vmatprep.subr.mxu0 0.0
    %646 = vmatpush1.msra.mxu0 %v526
    %647 = vmatprep.subr.mxu0 0.0
    %648 = vmatpush1.msra.mxu0 %v525
    %649 = vmatprep.subr.mxu0 0.0
    %650 = vmatpush1.msra.mxu0 %v524
    %651 = vmatprep.subr.mxu0 0.0
    %652 = vmatpush1.msra.mxu0 %v523
    %653 = vmatprep.subr.mxu0 0.0
    %654 = vmatpush1.msra.mxu0 %v522
    %655 = vmatprep.subr.mxu0 0.0
    %656 = vmatpush1.msra.mxu0 %v521
    %657 = vmatprep.subr.mxu0 0.0
    %658 = vmatpush1.msra.mxu0 %v520
    %659 = vmatprep.subr.mxu0 0.0
    %660 = vmatpush1.msra.mxu0 %v519
    %661 = vmatprep.subr.mxu0 0.0
    %662 = vmatpush1.msra.mxu0 %v518
    %663 = vmatprep.subr.mxu0 0.0
    %664 = vmatpush1.msra.mxu0 %v517
    %665 = vmatprep.subr.mxu0 0.0
    %666 = vmatpush1.msra.mxu0 %v516
    %667 = vmatprep.subr.mxu0 0.0
    %668 = vmatpush1.msra.mxu0 %v515
    %669 = vmatprep.subr.mxu0 0.0
    %670 = vmatpush1.msra.mxu0 %v514
    %671 = vmatprep.subr.mxu0 0.0
    %672 = vmatpush1.msra.mxu0 %v513
    %673 = vmatprep.subr.mxu0 0.0
    %674 = vmatpush1.msra.mxu0 %v512
    %675 = vmatprep.subr.mxu0 0.0
    %676 = vmatpush1.msra.mxu0 %v511
    %677 = vmatprep.subr.mxu0 0.0
    %678 = vmatpush2.msra.mxu0 %v542
    %679 = vmatprep.subr.mxu0 0.0
    %680 = vmatpush2.msra.mxu0 %v541
    %681 = vmatprep.subr.mxu0 0.0
    %682 = vmatpush2.msra.mxu0 %v540
    %683 = vmatprep.subr.mxu0 0.0
    %684 = vmatpush2.msra.mxu0 %v539
    %685 = vmatprep.subr.mxu0 0.0
    %686 = vmatpush2.msra.mxu0 %v538
    %687 = vmatprep.subr.mxu0 0.0
    %688 = vmatpush2.msra.mxu0 %v537
    %689 = vmatprep.subr.mxu0 0.0
    %690 = vmatpush2.msra.mxu0 %v536
    %691 = vmatprep.subr.mxu0 0.0
    %692 = vmatpush2.msra.mxu0 %v535
    %693 = vmatprep.subr.mxu0 0.0
    %694 = vmatpush2.msra.mxu0 %v534
    %695 = vmatprep.subr.mxu0 0.0
    %696 = vmatpush2.msra.mxu0 %v533
    %697 = vmatprep.subr.mxu0 0.0
    %698 = vmatpush2.msra.mxu0 %v532
    %699 = vmatprep.subr.mxu0 0.0
    %700 = vmatpush2.msra.mxu0 %v531
    %701 = vmatprep.subr.mxu0 0.0
    %702 = vmatpush2.msra.mxu0 %v530
    %703 = vmatprep.subr.mxu0 0.0
    %704 = vmatpush2.msra.mxu0 %v529
    %705 = vmatprep.subr.mxu0 0.0
    %706 = vmatpush2.msra.mxu0 %v528
    %707 = vmatprep.subr.mxu0 0.0
    %708 = vmatpush2.msra.mxu0 %v527
    %709 = vmatprep.mubr.f32.mxu0 %v458
    %710 = vmatmul.mubr.f32.gmra.mxu0 %v457
    %v711 = vpop.f32.mrf.mxu0
    %v712 = vadd.f32 %v617, %v711
    %v713 = vpop.f32.mrf.mxu0
    %714 = vmatprep.mubr.f32.mxu0 %v462
    %715 = vmatmul.mubr.f32.gmra.mxu0 %v461
    %v716 = vpop.f32.mrf.mxu0
    %v717 = vadd.f32 %v622, %v716
    %v718 = vpop.f32.mrf.mxu0
    %719 = vmatprep.mubr.f32.mxu0 %v466
    %720 = vmatmul.mubr.f32.gmra.mxu0 %v465
    %v721 = vpop.f32.mrf.mxu0
    %v722 = vadd.f32 %v627, %v721
    %v723 = vpop.f32.mrf.mxu0
    %724 = vmatprep.mubr.f32.mxu0 %v470
    %725 = vmatmul.mubr.f32.gmra.mxu0 %v469
    %v726 = vpop.f32.mrf.mxu0
    %v727 = vadd.f32 %v632, %v726
    %v728 = vpop.f32.mrf.mxu0
    %729 = vmatprep.mubr.f32.mxu0 %v474
    %730 = vmatmul.mubr.f32.gmra.mxu0 %v473
    %v731 = vpop.f32.mrf.mxu0
    %v732 = vadd.f32 %v637, %v731
    %v733 = vpop.f32.mrf.mxu0
    %734 = vmatprep.mubr.f32.mxu0 %v478
    %735 = vmatmul.mubr.f32.gmra.mxu0 %v477
    %v736 = vpop.f32.mrf.mxu0
    %v737 = vadd.f32 %v642, %v736
    %v738 = vpop.f32.mrf.mxu0
    %739 = vdwg.mxu0
    %740 = vst [vmem:[#allocation8] sm:$0xff] %v712
    %741 = vst [vmem:[#allocation8 + $0x8] sm:$0xff] %v717
    %742 = vst [vmem:[#allocation8 + $0x10] sm:$0xff] %v722
    %743 = vst [vmem:[#allocation8 + $0x18] sm:$0xff] %v727
    %744 = vst [vmem:[#allocation8 + $0x20] sm:$0xff] %v732
    %745 = vst [vmem:[#allocation8 + $0x28] sm:$0xff] %v737
    // Predicated region
    $region42: #{tpu_custom_call.1} parent=1 // pred_check
      _
    $region43: #{tpu_custom_call.1} parent=1 // pred_check_branch
      %747 = sbr.rel (0) target = $region45
    $region44: #{tpu_custom_call.1} parent=1 // pred_region
      %s749 = ssub.s32 768, 768
      %750 = vsyncadd [#allocation4], %s749
      %s751 = sshll.u32 [#allocation8], 4
      %s752 = int_to_ptr.vmem [resolvable:$true] %s751
      %757 = dma.vmem_to_hbm [thread:$0]  %s752, 768, %s7, [#allocation4], 128, 128, 8
    $region45: #{tpu_custom_call.1} parent=1 // pred_fallthru
      _
    // Predicated region
    $region46: #{tpu_custom_call.1} parent=1 // pred_check
      _
    $region47: #{tpu_custom_call.1} parent=1 // pred_check_branch
      %759 = sbr.rel (0) target = $region49
    $region48: #{tpu_custom_call.1} parent=1 // pred_region
      %760 = dma.done [#allocation4], 768
    $region49: #{tpu_custom_call.1} parent=1 // pred_fallthru
      _
    %761 = vsyncpa [#allocation3], 1
    %762 = vsyncpa [#allocation6], 1
    %763 = vsyncpa [#allocation4], 1

</llo_original>
